<compile_context>
chip_gen: v7x
topology: tpu7x:2x2x1
jax: 0.10.0
libtpu: 0.0.40
codegen_flags: <defaults>
</compile_context>

<pallas_src>
import numpy as np

import jax
import jax.numpy as jnp
from jax.experimental import pallas as pl
from jax.experimental.pallas import tpu as pltpu


# ----------------------------------------------------------------------------
# Gaussian window
# ----------------------------------------------------------------------------
def _gaussian_kernel_1d(window_size: int, sigma: float = 1.5) -> np.ndarray:
    """Matches kornia.filters.get_gaussian_kernel1d(window_size, sigma)."""
    x = np.arange(window_size, dtype=np.float64) - window_size // 2
    if window_size % 2 == 0:
        x = x + 0.5
    g = np.exp(-(x ** 2) / (2.0 * sigma ** 2))
    g = g / g.sum()
    return g


# ----------------------------------------------------------------------------
# In-kernel building blocks (trace-time helpers, all static shapes)
# ----------------------------------------------------------------------------
def _reflect_pad_axis(x, pad: int, axis: int):
    """Reflect (no edge repeat, like jnp.pad mode='reflect') along `axis`,
    built from 1-wide slice concats so it stays entirely in VMEM."""
    if pad == 0:
        return x
    length = x.shape[axis]

    def sl(i):
        idx = [slice(None)] * x.ndim
        idx[axis] = slice(i, i + 1)
        return x[tuple(idx)]

    front = [sl(k) for k in range(pad, 0, -1)]
    back = [sl(length - 1 - k) for k in range(1, pad + 1)]
    return jnp.concatenate(front + [x] + back, axis=axis)


def _gauss_pass(xp, wv, out_len: int, axis: int):
    """One separable gaussian pass along `axis` with symmetric-tap pairing.
    The shifted slices are shared by everything stacked along axis 0."""
    win = len(wv)
    half = win // 2

    def sl(start):
        idx = [slice(None)] * xp.ndim
        idx[axis] = slice(start, start + out_len)
        return xp[tuple(idx)]

    acc = wv[half] * sl(half)
    for d in range(half):
        acc = acc + wv[d] * (sl(d) + sl(win - 1 - d))
    return acc


def _ssim_loss_tile(a, b, wv, pad, H, W, c1, c2, eps):
    """a, b: (tn, H, W) f32 UNPADDED tiles.  Returns (tn, H, W) DSSIM loss."""
    tn = a.shape[0]

    # Products hoisted once (reflect padding commutes with elementwise mults).
    # Stacking lets both filter passes reuse the same shifted slices 5x.
    stacked = jnp.concatenate([a, b, a * a, b * b, a * b], axis=0)   # (5tn,H,W)

    # Row (sublane / dy) pass with in-VMEM reflect halo.
    xp = _reflect_pad_axis(stacked, pad, axis=1)                     # (5tn,H+2p,W)
    r = _gauss_pass(xp, wv, H, axis=1)                               # (5tn,H,W)

    # Column (lane / dx) pass with in-VMEM reflect halo.
    rp = _reflect_pad_axis(r, pad, axis=2)                           # (5tn,H,W+2p)
    f = _gauss_pass(rp, wv, W, axis=2)                               # (5tn,H,W)

    mu1, mu2 = f[:tn], f[tn:2 * tn]
    e11, e22, e12 = f[2 * tn:3 * tn], f[3 * tn:4 * tn], f[4 * tn:]

    mu1_sq = mu1 * mu1
    mu2_sq = mu2 * mu2
    mu1_mu2 = mu1 * mu2

    sigma1_sq = e11 - mu1_sq
    sigma2_sq = e22 - mu2_sq
    sigma12 = e12 - mu1_mu2

    num = (2.0 * mu1_mu2 + c1) * (2.0 * sigma12 + c2)
    den = (mu1_sq + mu2_sq + c1) * (sigma1_sq + sigma2_sq + c2)
    # Divide -> EUP reciprocal (approx=False: keep the 1e-5 tolerance).
    ssim_map = num * pl.reciprocal(den + eps, approx=False)
    return jnp.clip((1.0 - ssim_map) * 0.5, 0.0, 1.0)


def _make_partial_sum_kernel(wv, pad, H, W, c1, c2, eps, tn, N, Npad):
    """Per-tile partial sum only (no loss-map HBM writeback)."""
    need_mask = Npad > N

    def kernel(x1_ref, x2_ref, psum_ref):
        loss = _ssim_loss_tile(x1_ref[...], x2_ref[...],
                               wv, pad, H, W, c1, c2, eps)
        if need_mask:
            # Zero out contributions of the zero-padded tail images.
            img_idx = (jax.lax.broadcasted_iota(jnp.int32, (tn, H, W), 0)
                       + pl.program_id(0) * tn)
            loss = jnp.where(img_idx < N, loss, 0.0)
        s = jnp.sum(loss)
        # Lane-dense (1, 8, 128) output block; wrapper reads [:, 0, 0].
        psum_ref[...] = jnp.broadcast_to(s, (1, 8, 128)).astype(jnp.float32)

    return kernel


def _make_loss_map_kernel(wv, pad, H, W, c1, c2, eps):
    """Full loss map output (reduction='none')."""

    def kernel(x1_ref, x2_ref, loss_ref):
        loss_ref[...] = _ssim_loss_tile(x1_ref[...], x2_ref[...],
                                        wv, pad, H, W, c1, c2, eps)

    return kernel


# ----------------------------------------------------------------------------
# Wrapper
# ----------------------------------------------------------------------------
def _pick_vmem_limit() -> int:
    """Generation-aware scoped-VMEM limit (v7x: 64 MiB phys, v5e/v6e: 128)."""
    phys = 64 * 1024 * 1024  # conservative default (v7x)
    try:
        info = pltpu.get_tpu_info()
        phys = int(getattr(info, "vmem_capacity_bytes", phys))
    except Exception:
        pass
    return max(16 * 1024 * 1024, min(phys * 3 // 4, 96 * 1024 * 1024))


def ssim_loss_pallas(img1, img2, *, window_size: int, max_val: float = 1.0,
                     eps: float = 1e-12, reduction: str = "mean",
                     padding: str = "same"):
    """DSSIM loss. img1, img2: (B, C, H, W) float arrays."""
    assert img1.shape == img2.shape and img1.ndim == 4
    assert window_size % 2 == 1, "only odd window sizes supported"
    if padding != "same":
        # TODO(synk): 'valid' padding mode (crop after filtering).
        raise NotImplementedError("only padding='same' is implemented")
    B, C, H, W = img1.shape
    N = B * C
    pad = (window_size - 1) // 2
    assert pad < H and pad < W, "window_size too large for reflect padding"

    # No HBM-side reflect padding: kernel builds the halo in VMEM.
    x1 = img1.reshape(N, H, W).astype(jnp.float32)
    x2 = img2.reshape(N, H, W).astype(jnp.float32)

    # --- generation-aware VMEM / tile sizing -------------------------------
    vmem_limit = _pick_vmem_limit()
    # Peak in-kernel working set is ~15-20x the input tile (stacked tensor,
    # halo'd copies, filter results, ssim temps) plus 2 inputs x 2 pipeline
    # buffers -> conservative multiplier 24  (~2 MiB/tile v7x, ~4 MiB v5e/v6e).
    ws_mult = 24
    tile_budget = max(H * W * 4, vmem_limit // ws_mult)
    tn_vmem = max(1, tile_budget // (H * W * 4))
    tn_steps = max(1, -(-N // 8))        # keep >= ~8 grid steps (2 TCs on v7x)
    cap = max(1, min(tn_vmem, tn_steps, N))
    divisors = [d for d in range(1, cap + 1) if N % d == 0]
    tn_div = max(divisors)
    # Relaxed exact-divisor rule: only pad N when its divisors are poor.
    tn = tn_div if 2 * tn_div >= cap else cap
    grid_n = -(-N // tn)
    Npad = grid_n * tn
    if Npad > N:
        x1 = jnp.pad(x1, ((0, Npad - N), (0, 0), (0, 0)))
        x2 = jnp.pad(x2, ((0, Npad - N), (0, 0), (0, 0)))

    wv = [float(w) for w in _gaussian_kernel_1d(window_size)]
    c1 = (0.01 * max_val) ** 2
    c2 = (0.03 * max_val) ** 2

    in_specs = [
        pl.BlockSpec((tn, H, W), lambda i: (i, 0, 0)),
        pl.BlockSpec((tn, H, W), lambda i: (i, 0, 0)),
    ]
    cparams = pltpu.CompilerParams(
        dimension_semantics=("parallel",),
        vmem_limit_bytes=int(vmem_limit),
    )

    if reduction in ("mean", "sum"):
        kernel = _make_partial_sum_kernel(wv, pad, H, W, c1, c2, eps,
                                          tn, N, Npad)
        psums = pl.pallas_call(
            kernel,
            out_shape=jax.ShapeDtypeStruct((grid_n, 8, 128), jnp.float32),
            grid=(grid_n,),
            in_specs=in_specs,
            out_specs=pl.BlockSpec((1, 8, 128), lambda i: (i, 0, 0)),
            compiler_params=cparams,
        )(x1, x2)
        total = jnp.sum(psums[:, 0, 0])
        if reduction == "mean":
            return total / float(N * H * W)
        return total
    elif reduction == "none":
        kernel = _make_loss_map_kernel(wv, pad, H, W, c1, c2, eps)
        loss_map = pl.pallas_call(
            kernel,
            out_shape=jax.ShapeDtypeStruct((Npad, H, W), jnp.float32),
            grid=(grid_n,),
            in_specs=in_specs,
            out_specs=pl.BlockSpec((tn, H, W), lambda i: (i, 0, 0)),
            compiler_params=cparams,
        )(x1, x2)
        return loss_map[:N].reshape(B, C, H, W)
    else:
        raise NotImplementedError("Invalid reduction option.")


class SSIMLossPallas:
    """JAX/Pallas counterpart of the PyTorch SSIMLoss module."""

    def __init__(self, window_size: int, max_val: float = 1.0, eps: float = 1e-12,
                 reduction: str = "mean", padding: str = "same"):
        self.window_size = window_size
        self.max_val = max_val
        self.eps = eps
        self.reduction = reduction
        self.padding = padding

    def __call__(self, img1, img2):
        return ssim_loss_pallas(img1, img2, window_size=self.window_size,
                                max_val=self.max_val, eps=self.eps,
                                reduction=self.reduction, padding=self.padding)


# ----------------------------------------------------------------------------
# Pure-JAX reference (non-separable 2-D filter via shifted sums)
# ----------------------------------------------------------------------------
def _ref_loss(img1, img2, window_size=5, max_val=1.0, eps=1e-12):
    B, C, H, W = img1.shape
    N = B * C
    pad = (window_size - 1) // 2
    g = _gaussian_kernel_1d(window_size)
    w2d = np.outer(g, g)
    a = img1.reshape(N, H, W).astype(jnp.float32)
    b = img2.reshape(N, H, W).astype(jnp.float32)
    pa = jnp.pad(a, ((0, 0), (pad, pad), (pad, pad)), mode="reflect")
    pb = jnp.pad(b, ((0, 0), (pad, pad), (pad, pad)), mode="reflect")

    def filt(x):
        acc = jnp.zeros((N, H, W), jnp.float32)
        for dy in range(window_size):
            for dx in range(window_size):
                acc = acc + float(w2d[dy, dx]) * x[:, dy:dy + H, dx:dx + W]
        return acc

    mu1, mu2 = filt(pa), filt(pb)
    e11, e22, e12 = filt(pa * pa), filt(pb * pb), filt(pa * pb)
    c1, c2 = (0.01 * max_val) ** 2, (0.03 * max_val) ** 2
    s1 = e11 - mu1 * mu1
    s2 = e22 - mu2 * mu2
    s12 = e12 - mu1 * mu2
    ssim = ((2 * mu1 * mu2 + c1) * (2 * s12 + c2)) / \
           ((mu1 * mu1 + mu2 * mu2 + c1) * (s1 + s2 + c2) + eps)
    lm = jnp.clip((1.0 - ssim) * 0.5, 0.0, 1.0)
    return lm.reshape(B, C, H, W), jnp.mean(lm)


if __name__ == "__main__":
    key = jax.random.PRNGKey(0)
    k1, k2 = jax.random.split(key)
    B, C, H, W = 2, 4, 16, 16
    img1 = jax.random.uniform(k1, (B, C, H, W), dtype=jnp.float32)
    img2 = jax.random.uniform(k2, (B, C, H, W), dtype=jnp.float32)

    # 'mean' (default) — partial-sum kernel path
    criterion = SSIMLossPallas(window_size=5)
    loss = criterion(img1, img2)
    jax.block_until_ready(loss)

    # 'none' — loss-map kernel path
    loss_map = SSIMLossPallas(window_size=5, reduction="none")(img1, img2)
    jax.block_until_ready(loss_map)

    ref_map, ref_mean = _ref_loss(img1, img2, window_size=5)
    assert jnp.allclose(loss, ref_mean, atol=1e-5, rtol=1e-5), (loss, ref_mean)
    assert jnp.allclose(loss_map, ref_map, atol=1e-5, rtol=1e-5)
    print("KERNEL_OK")
</pallas_src>

<mosaic_0001>
module attributes {stable_mosaic.version = 11 : i64} {
  func.func @kernel(%arg0: i32, %arg1: memref<1x16x16xf32, #tpu.memory_space<vmem>>, %arg2: memref<1x16x16xf32, #tpu.memory_space<vmem>>, %arg3: memref<1x8x128xf32, #tpu.memory_space<vmem>>) attributes {dimension_semantics = [#tpu.dimension_semantics<parallel>], iteration_bounds = array<i64: 8>, scalar_prefetch = 0 : i64, scratch_operands = 0 : i64, tpu.core_type = #tpu.core_type<tc>, window_params = [{transform_indices = @transform_0, window_bounds = array<i64: 1, 16, 16>}, {transform_indices = @transform_1, window_bounds = array<i64: 1, 16, 16>}, {transform_indices = @transform_2, window_bounds = array<i64: 1, 8, 128>}]} {
    %c0 = arith.constant 0 : index
    %c0_0 = arith.constant 0 : index
    %c0_1 = arith.constant 0 : index
    %0 = vector.load %arg1[%c0, %c0_0, %c0_1] : memref<1x16x16xf32, #tpu.memory_space<vmem>>, vector<1x16x16xf32>
    %c0_2 = arith.constant 0 : index
    %c0_3 = arith.constant 0 : index
    %c0_4 = arith.constant 0 : index
    %1 = vector.load %arg2[%c0_2, %c0_3, %c0_4] : memref<1x16x16xf32, #tpu.memory_space<vmem>>, vector<1x16x16xf32>
    %2 = arith.mulf %0, %0 : vector<1x16x16xf32>
    %3 = arith.mulf %1, %1 : vector<1x16x16xf32>
    %4 = arith.mulf %0, %1 : vector<1x16x16xf32>
    %5 = tpu.concatenate %0, %1, %2, %3, %4 in 0 : vector<1x16x16xf32>, vector<1x16x16xf32>, vector<1x16x16xf32>, vector<1x16x16xf32>, vector<1x16x16xf32> -> vector<5x16x16xf32>
    %6 = vector.extract_strided_slice %5 {offsets = [0, 2, 0], sizes = [5, 1, 16], strides = [1, 1, 1]} : vector<5x16x16xf32> to vector<5x1x16xf32>
    %7 = vector.extract_strided_slice %5 {offsets = [0, 1, 0], sizes = [5, 1, 16], strides = [1, 1, 1]} : vector<5x16x16xf32> to vector<5x1x16xf32>
    %8 = vector.extract_strided_slice %5 {offsets = [0, 14, 0], sizes = [5, 1, 16], strides = [1, 1, 1]} : vector<5x16x16xf32> to vector<5x1x16xf32>
    %9 = vector.extract_strided_slice %5 {offsets = [0, 13, 0], sizes = [5, 1, 16], strides = [1, 1, 1]} : vector<5x16x16xf32> to vector<5x1x16xf32>
    %10 = tpu.concatenate %6, %7, %5, %8, %9 in 1 : vector<5x1x16xf32>, vector<5x1x16xf32>, vector<5x16x16xf32>, vector<5x1x16xf32>, vector<5x1x16xf32> -> vector<5x20x16xf32>
    %11 = vector.extract_strided_slice %10 {offsets = [0, 2, 0], sizes = [5, 16, 16], strides = [1, 1, 1]} : vector<5x20x16xf32> to vector<5x16x16xf32>
    %cst = arith.constant 0.292081714 : f32
    %12 = vector.broadcast %cst : f32 to vector<5x16x16xf32>
    %13 = arith.mulf %12, %11 : vector<5x16x16xf32>
    %14 = vector.extract_strided_slice %10 {offsets = [0, 0, 0], sizes = [5, 16, 16], strides = [1, 1, 1]} : vector<5x20x16xf32> to vector<5x16x16xf32>
    %15 = vector.extract_strided_slice %10 {offsets = [0, 4, 0], sizes = [5, 16, 16], strides = [1, 1, 1]} : vector<5x20x16xf32> to vector<5x16x16xf32>
    %16 = arith.addf %14, %15 : vector<5x16x16xf32>
    %cst_5 = arith.constant 0.120078385 : f32
    %17 = vector.broadcast %cst_5 : f32 to vector<5x16x16xf32>
    %18 = arith.mulf %17, %16 : vector<5x16x16xf32>
    %19 = arith.addf %13, %18 : vector<5x16x16xf32>
    %20 = vector.extract_strided_slice %10 {offsets = [0, 1, 0], sizes = [5, 16, 16], strides = [1, 1, 1]} : vector<5x20x16xf32> to vector<5x16x16xf32>
    %21 = vector.extract_strided_slice %10 {offsets = [0, 3, 0], sizes = [5, 16, 16], strides = [1, 1, 1]} : vector<5x20x16xf32> to vector<5x16x16xf32>
    %22 = arith.addf %20, %21 : vector<5x16x16xf32>
    %cst_6 = arith.constant 0.233880758 : f32
    %23 = vector.broadcast %cst_6 : f32 to vector<5x16x16xf32>
    %24 = arith.mulf %23, %22 : vector<5x16x16xf32>
    %25 = arith.addf %19, %24 : vector<5x16x16xf32>
    %26 = vector.extract_strided_slice %25 {offsets = [0, 0, 2], sizes = [5, 16, 1], strides = [1, 1, 1]} : vector<5x16x16xf32> to vector<5x16x1xf32>
    %27 = vector.extract_strided_slice %25 {offsets = [0, 0, 1], sizes = [5, 16, 1], strides = [1, 1, 1]} : vector<5x16x16xf32> to vector<5x16x1xf32>
    %28 = vector.extract_strided_slice %25 {offsets = [0, 0, 14], sizes = [5, 16, 1], strides = [1, 1, 1]} : vector<5x16x16xf32> to vector<5x16x1xf32>
    %29 = vector.extract_strided_slice %25 {offsets = [0, 0, 13], sizes = [5, 16, 1], strides = [1, 1, 1]} : vector<5x16x16xf32> to vector<5x16x1xf32>
    %30 = tpu.concatenate %26, %27, %25, %28, %29 in 2 : vector<5x16x1xf32>, vector<5x16x1xf32>, vector<5x16x16xf32>, vector<5x16x1xf32>, vector<5x16x1xf32> -> vector<5x16x20xf32>
    %31 = vector.extract_strided_slice %30 {offsets = [0, 0, 2], sizes = [5, 16, 16], strides = [1, 1, 1]} : vector<5x16x20xf32> to vector<5x16x16xf32>
    %cst_7 = arith.constant 0.292081714 : f32
    %32 = vector.broadcast %cst_7 : f32 to vector<5x16x16xf32>
    %33 = arith.mulf %32, %31 : vector<5x16x16xf32>
    %34 = vector.extract_strided_slice %30 {offsets = [0, 0, 0], sizes = [5, 16, 16], strides = [1, 1, 1]} : vector<5x16x20xf32> to vector<5x16x16xf32>
    %35 = vector.extract_strided_slice %30 {offsets = [0, 0, 4], sizes = [5, 16, 16], strides = [1, 1, 1]} : vector<5x16x20xf32> to vector<5x16x16xf32>
    %36 = arith.addf %34, %35 : vector<5x16x16xf32>
    %cst_8 = arith.constant 0.120078385 : f32
    %37 = vector.broadcast %cst_8 : f32 to vector<5x16x16xf32>
    %38 = arith.mulf %37, %36 : vector<5x16x16xf32>
    %39 = arith.addf %33, %38 : vector<5x16x16xf32>
    %40 = vector.extract_strided_slice %30 {offsets = [0, 0, 1], sizes = [5, 16, 16], strides = [1, 1, 1]} : vector<5x16x20xf32> to vector<5x16x16xf32>
    %41 = vector.extract_strided_slice %30 {offsets = [0, 0, 3], sizes = [5, 16, 16], strides = [1, 1, 1]} : vector<5x16x20xf32> to vector<5x16x16xf32>
    %42 = arith.addf %40, %41 : vector<5x16x16xf32>
    %cst_9 = arith.constant 0.233880758 : f32
    %43 = vector.broadcast %cst_9 : f32 to vector<5x16x16xf32>
    %44 = arith.mulf %43, %42 : vector<5x16x16xf32>
    %45 = arith.addf %39, %44 : vector<5x16x16xf32>
    %46 = vector.extract_strided_slice %45 {offsets = [0, 0, 0], sizes = [1, 16, 16], strides = [1, 1, 1]} : vector<5x16x16xf32> to vector<1x16x16xf32>
    %47 = vector.extract_strided_slice %45 {offsets = [1, 0, 0], sizes = [1, 16, 16], strides = [1, 1, 1]} : vector<5x16x16xf32> to vector<1x16x16xf32>
    %48 = vector.extract_strided_slice %45 {offsets = [2, 0, 0], sizes = [1, 16, 16], strides = [1, 1, 1]} : vector<5x16x16xf32> to vector<1x16x16xf32>
    %49 = vector.extract_strided_slice %45 {offsets = [3, 0, 0], sizes = [1, 16, 16], strides = [1, 1, 1]} : vector<5x16x16xf32> to vector<1x16x16xf32>
    %50 = vector.extract_strided_slice %45 {offsets = [4, 0, 0], sizes = [1, 16, 16], strides = [1, 1, 1]} : vector<5x16x16xf32> to vector<1x16x16xf32>
    %51 = arith.mulf %46, %46 : vector<1x16x16xf32>
    %52 = arith.mulf %47, %47 : vector<1x16x16xf32>
    %53 = arith.mulf %46, %47 : vector<1x16x16xf32>
    %54 = arith.subf %48, %51 : vector<1x16x16xf32>
    %55 = arith.subf %49, %52 : vector<1x16x16xf32>
    %56 = arith.subf %50, %53 : vector<1x16x16xf32>
    %cst_10 = arith.constant 2.000000e+00 : f32
    %57 = vector.broadcast %cst_10 : f32 to vector<1x16x16xf32>
    %58 = arith.mulf %57, %53 : vector<1x16x16xf32>
    %cst_11 = arith.constant 9.99999974E-5 : f32
    %59 = vector.broadcast %cst_11 : f32 to vector<1x16x16xf32>
    %60 = arith.addf %58, %59 : vector<1x16x16xf32>
    %cst_12 = arith.constant 2.000000e+00 : f32
    %61 = vector.broadcast %cst_12 : f32 to vector<1x16x16xf32>
    %62 = arith.mulf %61, %56 : vector<1x16x16xf32>
    %cst_13 = arith.constant 8.99999984E-4 : f32
    %63 = vector.broadcast %cst_13 : f32 to vector<1x16x16xf32>
    %64 = arith.addf %62, %63 : vector<1x16x16xf32>
    %65 = arith.mulf %60, %64 : vector<1x16x16xf32>
    %66 = arith.addf %51, %52 : vector<1x16x16xf32>
    %cst_14 = arith.constant 9.99999974E-5 : f32
    %67 = vector.broadcast %cst_14 : f32 to vector<1x16x16xf32>
    %68 = arith.addf %66, %67 : vector<1x16x16xf32>
    %69 = arith.addf %54, %55 : vector<1x16x16xf32>
    %cst_15 = arith.constant 8.99999984E-4 : f32
    %70 = vector.broadcast %cst_15 : f32 to vector<1x16x16xf32>
    %71 = arith.addf %69, %70 : vector<1x16x16xf32>
    %72 = arith.mulf %68, %71 : vector<1x16x16xf32>
    %cst_16 = arith.constant 9.99999996E-13 : f32
    %73 = vector.broadcast %cst_16 : f32 to vector<1x16x16xf32>
    %74 = arith.addf %72, %73 : vector<1x16x16xf32>
    %75 = tpu.reciprocal %74 : vector<1x16x16xf32> -> vector<1x16x16xf32>
    %76 = arith.mulf %65, %75 : vector<1x16x16xf32>
    %cst_17 = arith.constant 1.000000e+00 : f32
    %77 = vector.broadcast %cst_17 : f32 to vector<1x16x16xf32>
    %78 = arith.subf %77, %76 : vector<1x16x16xf32>
    %cst_18 = arith.constant 5.000000e-01 : f32
    %79 = vector.broadcast %cst_18 : f32 to vector<1x16x16xf32>
    %80 = arith.mulf %78, %79 : vector<1x16x16xf32>
    %cst_19 = arith.constant 0.000000e+00 : f32
    %cst_20 = arith.constant 1.000000e+00 : f32
    %81 = vector.broadcast %cst_19 : f32 to vector<1x16x16xf32>
    %82 = arith.maximumf %81, %80 : vector<1x16x16xf32>
    %83 = vector.broadcast %cst_20 : f32 to vector<1x16x16xf32>
    %84 = arith.minimumf %83, %82 : vector<1x16x16xf32>
    %85 = vector.shape_cast %84 : vector<1x16x16xf32> to vector<1x1x16x16xf32>
    %cst_21 = arith.constant dense<0.000000e+00> : vector<1xf32>
    %86 = vector.multi_reduction <add>, %85, %cst_21 [1, 2, 3] : vector<1x1x16x16xf32> to vector<1xf32>
    %87 = vector.shape_cast %86 : vector<1xf32> to vector<1x1x1x1xf32>
    %88 = vector.extract %87[0, 0, 0, 0] : f32 from vector<1x1x1x1xf32>
    %89 = vector.broadcast %88 : f32 to vector<1x8x128xf32>
    %c0_22 = arith.constant 0 : index
    %c0_23 = arith.constant 0 : index
    %c0_24 = arith.constant 0 : index
    %90 = vector.load %arg3[%c0_22, %c0_23, %c0_24] : memref<1x8x128xf32, #tpu.memory_space<vmem>>, vector<1x8x128xf32>
    tpu.vector_store %arg3[%c0_22, %c0_23, %c0_24], %89 {strides = array<i32>} : memref<1x8x128xf32, #tpu.memory_space<vmem>>, vector<1x8x128xf32>,
    return
  }
  func.func @transform_0(%arg0: i32) -> (i32, i32, i32) {
    %c0_i32 = arith.constant 0 : i32
    %c0_i32_0 = arith.constant 0 : i32
    %c0_i32_1 = arith.constant 0 : i32
    return %arg0, %c0_i32, %c0_i32_0 : i32, i32, i32
  }
  func.func @transform_1(%arg0: i32) -> (i32, i32, i32) {
    %c0_i32 = arith.constant 0 : i32
    %c0_i32_0 = arith.constant 0 : i32
    %c0_i32_1 = arith.constant 0 : i32
    return %arg0, %c0_i32, %c0_i32_0 : i32, i32, i32
  }
  func.func @transform_2(%arg0: i32) -> (i32, i32, i32) {
    %c0_i32 = arith.constant 0 : i32
    %c0_i32_0 = arith.constant 0 : i32
    %c0_i32_1 = arith.constant 0 : i32
    return %arg0, %c0_i32, %c0_i32_0 : i32, i32, i32
  }
}

</mosaic_0001>

<llo_original>
// kernel: tpu_custom_call.1
$region0: #{tpu_custom_call.1}
  #allocation0 [shape = 'u32[]', space=smem, size = 0x4, offset = 0x4, fixed_abs, tag = 'smem constant byte address 0x4 - core index']
  #allocation1 [shape = 'u32[144,128]{1,0:T(1,128)}', space=vmem, size = 0x12000, scoped, tag = 'internal scratch']
  %s0 = inlined_call_operand.hbm [shape: f32[8,16,16], index: 0, kind: input, shape index: {}]
  %s1 = inlined_call_operand.hbm [shape: f32[8,16,16], index: 1, kind: input, shape index: {}]
  %s2 = inlined_call_operand.hbm [shape: f32[8,8,128], index: 2, kind: output, shape index: {}]
  %s3 = sld [smem:[#allocation0]]
  $region49: #{tpu_custom_call.1} parent=0
    _
  %s5 = ssub.s32 1, %s3
  %s6 = scalar_select 0, %s5, %s3
  $region1: #{tpu_custom_call.1} parent=0
    #allocation2 [shape = 'u8[16384]{0}', space=vmem, size = 0x4000, scoped, tag = 'input window, operand 0']
    #allocation3 [shape = 's32[2]{0}', space=sflag, size = 0x8, scoped, tag = 'scoped memory for tpu_custom_call.1']
    #allocation4 [shape = 's32[2]{0}', space=sflag, size = 0x8, scoped, tag = 'scoped memory for tpu_custom_call.1']
    #allocation5 [shape = 'u8[16384]{0}', space=vmem, size = 0x4000, scoped, tag = 'input window, operand 1']
    #allocation6 [shape = 's32[2]{0}', space=sflag, size = 0x8, scoped, tag = 'scoped memory for tpu_custom_call.1']
    #allocation7 [shape = 'u8[8192]{0}', space=vmem, size = 0x2000, scoped, tag = 'output window, operand 0']
    %7 = vsyncpa [#allocation3], 0
    %s8 = scalar_lea.sflag [#allocation3], 1
    %9 = vsyncpa %s8, 0
    %10 = vsyncpa [#allocation6], 0
    %s11 = scalar_lea.sflag [#allocation6], 1
    %12 = vsyncpa %s11, 0
    %13 = vsyncpa [#allocation4], 0
    %s14 = scalar_lea.sflag [#allocation4], 1
    %15 = vsyncpa %s14, 0
    loop: start=0, step=1, limit=10
    $region2: #{tpu_custom_call.1} parent=1 // loop_pre_header
      _
    $region3: #{tpu_custom_call.1} parent=1 // loop_header
      %s17 = sphi 0, %s21
      %p18 = scmp.ge.s32.totalorder %s17, 10
      %s27 = sphi 0, %s29
      %s30 = sphi 0, %s27
      %s31 = sphi 0, %s30
      %s47 = sphi 0, %s31
      %s53 = sphi 0, %s55
      %s56 = sphi 0, %s53
      %s57 = sphi 0, %s56
      %s73 = sphi 0, %s57
      %s79 = sphi 0, %s81
      %s82 = sphi 0, %s79
      %s83 = sphi 0, %s82
      %s99 = sphi 0, %s83
    $region4: #{tpu_custom_call.1} parent=1 // loop_header_branch
      %20 = sbr.rel (%p18) target = $region8
    $region5: #{tpu_custom_call.1} parent=1 // loop_body
      %s22 = ssub.s32 %s17, 1
      %s23 = ssub.s32 %s17, 2
      %s24 = sadd.s32 %s17, 1
      %s25 = ssub.s32 %s17, %s24
      %p26 = scmp.eq.s32.totalorder %s25, 0
      %s28 = sadd.s32 %s27, 1
      %s29 = scalar_select %p26, %s27, %s28
      %p32 = pneg %p26
      %p33 = scmp.eq.s32.totalorder %s17, 7
      %p34 = por %p32, %p33
      %p35 = scmp.ne.s32.totalorder %s27, %s30
      %p36 = scmp.eq.s32.totalorder %s17, 0
      %p37 = por %p35, %p36
      %p38 = scmp.ne.s32.totalorder %s27, %s30
      %p39 = scmp.eq.s32.totalorder %s22, 7
      %p40 = por %p38, %p39
      %p41 = scmp.ne.s32.totalorder %s30, %s31
      %p42 = scmp.eq.s32.totalorder %s22, 0
      %p43 = por %p41, %p42
      %p44 = scmp.ne.s32.totalorder %s30, %s31
      %p45 = scmp.eq.s32.totalorder %s23, 7
      %p46 = por %p44, %p45
      %p48 = scmp.ne.s32.totalorder %s31, %s47
      %p49 = scmp.eq.s32.totalorder %s23, 0
      %p50 = por %p48, %p49
      %s51 = ssub.s32 %s17, %s24
      %p52 = scmp.eq.s32.totalorder %s51, 0
      %s54 = sadd.s32 %s53, 1
      %s55 = scalar_select %p52, %s53, %s54
      %p58 = pneg %p52
      %p59 = scmp.eq.s32.totalorder %s17, 7
      %p60 = por %p58, %p59
      %p61 = scmp.ne.s32.totalorder %s53, %s56
      %p62 = scmp.eq.s32.totalorder %s17, 0
      %p63 = por %p61, %p62
      %p64 = scmp.ne.s32.totalorder %s53, %s56
      %p65 = scmp.eq.s32.totalorder %s22, 7
      %p66 = por %p64, %p65
      %p67 = scmp.ne.s32.totalorder %s56, %s57
      %p68 = scmp.eq.s32.totalorder %s22, 0
      %p69 = por %p67, %p68
      %p70 = scmp.ne.s32.totalorder %s56, %s57
      %p71 = scmp.eq.s32.totalorder %s23, 7
      %p72 = por %p70, %p71
      %p74 = scmp.ne.s32.totalorder %s57, %s73
      %p75 = scmp.eq.s32.totalorder %s23, 0
      %p76 = por %p74, %p75
      %s77 = ssub.s32 %s17, %s24
      %p78 = scmp.eq.s32.totalorder %s77, 0
      %s80 = sadd.s32 %s79, 1
      %s81 = scalar_select %p78, %s79, %s80
      %p84 = pneg %p78
      %p85 = scmp.eq.s32.totalorder %s17, 7
      %p86 = por %p84, %p85
      %p87 = scmp.ne.s32.totalorder %s79, %s82
      %p88 = scmp.eq.s32.totalorder %s17, 0
      %p89 = por %p87, %p88
      %p90 = scmp.ne.s32.totalorder %s79, %s82
      %p91 = scmp.eq.s32.totalorder %s22, 7
      %p92 = por %p90, %p91
      %p93 = scmp.ne.s32.totalorder %s82, %s83
      %p94 = scmp.eq.s32.totalorder %s22, 0
      %p95 = por %p93, %p94
      %p96 = scmp.ne.s32.totalorder %s82, %s83
      %p97 = scmp.eq.s32.totalorder %s23, 7
      %p98 = por %p96, %p97
      %p100 = scmp.ne.s32.totalorder %s83, %s99
      %p101 = scmp.eq.s32.totalorder %s23, 0
      %p102 = por %p100, %p101
      %p103 = scmp.le.s32.totalorder 1, %s17
      %p104 = scmp.lt.s32.totalorder %s17, 9
      %p105 = pnand %p103, %p104
      %p106 = pneg %p105
      // Predicated region
      $region9: #{tpu_custom_call.1} parent=5 // pred_check
        _
      $region10: #{tpu_custom_call.1} parent=5 // pred_check_branch
        %108 = sbr.rel (%p105) target = $region12
      $region11: #{tpu_custom_call.1} parent=5 // pred_region
        %s109 = ssub.s32 %s17, 1
      $region12: #{tpu_custom_call.1} parent=5 // pred_fallthru
        _
      %p110 = scmp.lt.s32.totalorder %s17, 8
      // Predicated region
      $region13: #{tpu_custom_call.1} parent=5 // pred_check
        %p111 = pneg %p110
      $region14: #{tpu_custom_call.1} parent=5 // pred_check_branch
        %113 = sbr.rel (%p111) target = $region16
      $region15: #{tpu_custom_call.1} parent=5 // pred_region
        // Predicated region
        $region17: #{tpu_custom_call.1} parent=15 // pred_check
          %p114 = pneg %p37
        $region18: #{tpu_custom_call.1} parent=15 // pred_check_branch
          %116 = sbr.rel (%p114) target = $region20
        $region19: #{tpu_custom_call.1} parent=15 // pred_region
          %s117 = sand.u32 %s27, 1
          %s118 = scalar_lea.sflag [#allocation3], %s117
          %s119 = sand.u32 %s27, 1
          %s120 = smul.addr %s119, 16
          %s121 = scalar_lea.vmem [#allocation2], %s120
          %s123 = ssub.s32 256, 256
          %124 = vsyncadd %s118, %s123
          %s125 = smul.addr %s17, 2
          %s126 = smul.addr %s125, 128
          %s127 = scalar_lea.hbm %s0, %s126
          %s128 = sshll.u32 %s121, 4
          %s129 = int_to_ptr.vmem [resolvable:$true] %s128
          %134 = dma.hbm_to_vmem [thread:$0]  %s127, 256, %s129, %s118, 128, 128, 8
        $region20: #{tpu_custom_call.1} parent=15 // pred_fallthru
          _
        // Predicated region
        $region21: #{tpu_custom_call.1} parent=15 // pred_check
          %p135 = pneg %p63
        $region22: #{tpu_custom_call.1} parent=15 // pred_check_branch
          %137 = sbr.rel (%p135) target = $region24
        $region23: #{tpu_custom_call.1} parent=15 // pred_region
          %s138 = sand.u32 %s53, 1
          %s139 = scalar_lea.sflag [#allocation6], %s138
          %s140 = sand.u32 %s53, 1
          %s141 = smul.addr %s140, 16
          %s142 = scalar_lea.vmem [#allocation5], %s141
          %s144 = ssub.s32 256, 256
          %145 = vsyncadd %s139, %s144
          %s146 = smul.addr %s17, 2
          %s147 = smul.addr %s146, 128
          %s148 = scalar_lea.hbm %s1, %s147
          %s149 = sshll.u32 %s142, 4
          %s150 = int_to_ptr.vmem [resolvable:$true] %s149
          %155 = dma.hbm_to_vmem [thread:$0]  %s148, 256, %s150, %s139, 128, 128, 8
        $region24: #{tpu_custom_call.1} parent=15 // pred_fallthru
          _
      $region16: #{tpu_custom_call.1} parent=5 // pred_fallthru
        _
      %p156 = scmp.le.s32.totalorder 1, %s17
      %p157 = scmp.lt.s32.totalorder %s17, 9
      %p158 = pnand %p156, %p157
      %p159 = pneg %p158
      // Predicated region
      $region25: #{tpu_custom_call.1} parent=5 // pred_check
        _
      $region26: #{tpu_custom_call.1} parent=5 // pred_check_branch
        %161 = sbr.rel (%p158) target = $region28
      $region27: #{tpu_custom_call.1} parent=5 // pred_region
        %s162 = ssub.s32 %s17, 1
        %s163 = sand.u32 %s30, 1
        %s164 = scalar_lea.sflag [#allocation3], %s163
        %s165 = sand.u32 %s30, 1
        %s166 = smul.addr %s165, 16
        %s167 = scalar_lea.vmem [#allocation2], %s166
        // Predicated region
        $region29: #{tpu_custom_call.1} parent=27 // pred_check
          %p168 = pneg %p43
        $region30: #{tpu_custom_call.1} parent=27 // pred_check_branch
          %170 = sbr.rel (%p168) target = $region32
        $region31: #{tpu_custom_call.1} parent=27 // pred_region
          %171 = dma.done %s164, 256
        $region32: #{tpu_custom_call.1} parent=27 // pred_fallthru
          _
        %s172 = sand.u32 %s56, 1
        %s173 = scalar_lea.sflag [#allocation6], %s172
        %s174 = sand.u32 %s56, 1
        %s175 = smul.addr %s174, 16
        %s176 = scalar_lea.vmem [#allocation5], %s175
        // Predicated region
        $region33: #{tpu_custom_call.1} parent=27 // pred_check
          %p177 = pneg %p69
        $region34: #{tpu_custom_call.1} parent=27 // pred_check_branch
          %179 = sbr.rel (%p177) target = $region36
        $region35: #{tpu_custom_call.1} parent=27 // pred_region
          %180 = dma.done %s173, 256
        $region36: #{tpu_custom_call.1} parent=27 // pred_fallthru
          _
        %s181 = sand.u32 %s30, 1
        %s182 = scalar_lea.sflag [#allocation3], %s181
        %s183 = sand.u32 %s30, 1
        %s184 = smul.addr %s183, 16
        %s185 = scalar_lea.vmem [#allocation2], %s184
        %p186 = pneg %p43
        %p187 = pneg %p40
        %s188 = sand.u32 %s56, 1
        %s189 = scalar_lea.sflag [#allocation6], %s188
        %s190 = sand.u32 %s56, 1
        %s191 = smul.addr %s190, 16
        %s192 = scalar_lea.vmem [#allocation5], %s191
        %p193 = pneg %p69
        %p194 = pneg %p66
        %p195 = pneg %p95
        %p196 = pneg %p92
        %s197 = sand.u32 %s82, 1
        %s198 = scalar_lea.sflag [#allocation4], %s197
        %s199 = sand.u32 %s82, 1
        %s200 = smul.addr %s199, 8
        %s201 = scalar_lea.vmem [#allocation7], %s200
        %v202 = vld [vmem:[%s167] sm:$0xff]
        %v203 = vld [vmem:[%s167 + $0x8] sm:$0xff]
        %v204 = vld [vmem:[%s176] sm:$0xff]
        %v205 = vld [vmem:[%s176 + $0x8] sm:$0xff]
        %v206 = vmul.f32 %v202, %v202
        %v207 = vmul.f32 %v203, %v203
        %v208 = vmul.f32 %v204, %v204
        %v209 = vmul.f32 %v205, %v205
        %v210 = vmul.f32 %v202, %v204
        %v211 = vmul.f32 %v203, %v205
        %v217 = vrot.slane %v202, 2
        %v218 = vrot.slane %v204, 2
        %v219 = vrot.slane %v206, 2
        %v220 = vrot.slane %v208, 2
        %v221 = vrot.slane %v210, 2
        %vm232 = vcmask 1041408
        %v233 = vrot.slane %v202, 6
        %v234 = vrot.slane %v203, 6
        %v235 = vsel %vm232, %v233, %v234
        %v236 = vrot.slane %v204, 6
        %v237 = vrot.slane %v205, 6
        %v238 = vsel %vm232, %v236, %v237
        %v239 = vrot.slane %v206, 6
        %v240 = vrot.slane %v207, 6
        %v241 = vsel %vm232, %v239, %v240
        %v242 = vrot.slane %v208, 6
        %v243 = vrot.slane %v209, 6
        %v244 = vsel %vm232, %v242, %v243
        %v245 = vrot.slane %v210, 6
        %v246 = vrot.slane %v211, 6
        %v247 = vsel %vm232, %v245, %v246
        %v263 = vrot.slane %v203, 4
        %v264 = vrot.slane %v205, 4
        %v265 = vrot.slane %v207, 4
        %v266 = vrot.slane %v209, 4
        %v267 = vrot.slane %v211, 4
        %v273 = vrot.slane %v203, 2
        %v274 = vrot.slane %v205, 2
        %v275 = vrot.slane %v207, 2
        %v276 = vrot.slane %v209, 2
        %v277 = vrot.slane %v211, 2
        %vm283 = vcmask 1040384
        %v284 = vsel %vm283, %v217, %v202
        %v285 = vsel %vm283, %v218, %v204
        %v286 = vsel %vm283, %v219, %v206
        %v287 = vsel %vm283, %v220, %v208
        %v288 = vsel %vm283, %v221, %v210
        %v289 = vsel %vm232, %v284, %v233
        %v290 = vsel %vm232, %v285, %v236
        %v291 = vsel %vm232, %v286, %v239
        %v292 = vsel %vm232, %v287, %v242
        %v293 = vsel %vm232, %v288, %v245
        %v294 = vsel %vm232, %v234, %v263
        %v295 = vsel %vm232, %v237, %v264
        %v296 = vsel %vm232, %v240, %v265
        %v297 = vsel %vm232, %v243, %v266
        %v298 = vsel %vm232, %v246, %v267
        %vm299 = vcmask 1042432
        %v300 = vsel %vm299, %v294, %v273
        %v301 = vsel %vm299, %v295, %v274
        %v302 = vsel %vm299, %v296, %v275
        %v303 = vsel %vm299, %v297, %v276
        %v304 = vsel %vm299, %v298, %v277
        %v305 = vmul.f32 %v289, 0.2920817
        %v306 = vmul.f32 %v235, 0.2920817
        %v307 = vmul.f32 %v300, 0.2920817
        %v308 = vmul.f32 %v290, 0.2920817
        %v309 = vmul.f32 %v238, 0.2920817
        %v310 = vmul.f32 %v301, 0.2920817
        %v311 = vmul.f32 %v291, 0.2920817
        %v312 = vmul.f32 %v241, 0.2920817
        %v313 = vmul.f32 %v302, 0.2920817
        %v314 = vmul.f32 %v292, 0.2920817
        %v315 = vmul.f32 %v244, 0.2920817
        %v316 = vmul.f32 %v303, 0.2920817
        %v317 = vmul.f32 %v293, 0.2920817
        %v318 = vmul.f32 %v247, 0.2920817
        %v319 = vmul.f32 %v304, 0.2920817
        %vm330 = vcmask 1043456
        %v331 = vrot.slane %v289, 4
        %v332 = vrot.slane %v235, 4
        %v333 = vsel %vm330, %v331, %v332
        %v334 = vrot.slane %v300, 4
        %v335 = vsel %vm330, %v332, %v334
        %v336 = vrot.slane %v290, 4
        %v337 = vrot.slane %v238, 4
        %v338 = vsel %vm330, %v336, %v337
        %v339 = vrot.slane %v301, 4
        %v340 = vsel %vm330, %v337, %v339
        %v341 = vrot.slane %v291, 4
        %v342 = vrot.slane %v241, 4
        %v343 = vsel %vm330, %v341, %v342
        %v344 = vrot.slane %v302, 4
        %v345 = vsel %vm330, %v342, %v344
        %v346 = vrot.slane %v292, 4
        %v347 = vrot.slane %v244, 4
        %v348 = vsel %vm330, %v346, %v347
        %v349 = vrot.slane %v303, 4
        %v350 = vsel %vm330, %v347, %v349
        %v351 = vrot.slane %v293, 4
        %v352 = vrot.slane %v247, 4
        %v353 = vsel %vm330, %v351, %v352
        %v354 = vrot.slane %v304, 4
        %v355 = vsel %vm330, %v352, %v354
        %v366 = vadd.f32 %v289, %v333
        %v367 = vadd.f32 %v235, %v335
        %v368 = vadd.f32 %v290, %v338
        %v369 = vadd.f32 %v238, %v340
        %v370 = vadd.f32 %v291, %v343
        %v371 = vadd.f32 %v241, %v345
        %v372 = vadd.f32 %v292, %v348
        %v373 = vadd.f32 %v244, %v350
        %v374 = vadd.f32 %v293, %v353
        %v375 = vadd.f32 %v247, %v355
        %v376 = vmul.f32 %v366, 0.120078385
        %v377 = vmul.f32 %v367, 0.120078385
        %v378 = vmul.f32 %v368, 0.120078385
        %v379 = vmul.f32 %v369, 0.120078385
        %v380 = vmul.f32 %v370, 0.120078385
        %v381 = vmul.f32 %v371, 0.120078385
        %v382 = vmul.f32 %v372, 0.120078385
        %v383 = vmul.f32 %v373, 0.120078385
        %v384 = vmul.f32 %v374, 0.120078385
        %v385 = vmul.f32 %v375, 0.120078385
        %v396 = vrot.slane %v376, 6
        %v397 = vrot.slane %v377, 6
        %v398 = vsel %vm232, %v396, %v397
        %v399 = vrot.slane %v378, 6
        %v400 = vrot.slane %v379, 6
        %v401 = vsel %vm232, %v399, %v400
        %v402 = vrot.slane %v380, 6
        %v403 = vrot.slane %v381, 6
        %v404 = vsel %vm232, %v402, %v403
        %v405 = vrot.slane %v382, 6
        %v406 = vrot.slane %v383, 6
        %v407 = vsel %vm232, %v405, %v406
        %v408 = vrot.slane %v384, 6
        %v409 = vrot.slane %v385, 6
        %v410 = vsel %vm232, %v408, %v409
        %v426 = vadd.f32 %v305, %v396
        %v427 = vadd.f32 %v306, %v398
        %v428 = vadd.f32 %v307, %v397
        %v429 = vadd.f32 %v308, %v399
        %v430 = vadd.f32 %v309, %v401
        %v431 = vadd.f32 %v310, %v400
        %v432 = vadd.f32 %v311, %v402
        %v433 = vadd.f32 %v312, %v404
        %v434 = vadd.f32 %v313, %v403
        %v435 = vadd.f32 %v314, %v405
        %v436 = vadd.f32 %v315, %v407
        %v437 = vadd.f32 %v316, %v406
        %v438 = vadd.f32 %v317, %v408
        %v439 = vadd.f32 %v318, %v410
        %v440 = vadd.f32 %v319, %v409
        %vm441 = vcmask 1045504
        %v442 = vrot.slane %v289, 2
        %v443 = vrot.slane %v235, 2
        %v444 = vsel %vm441, %v442, %v443
        %v445 = vrot.slane %v300, 2
        %v446 = vsel %vm441, %v443, %v445
        %v447 = vrot.slane %v290, 2
        %v448 = vrot.slane %v238, 2
        %v449 = vsel %vm441, %v447, %v448
        %v450 = vrot.slane %v301, 2
        %v451 = vsel %vm441, %v448, %v450
        %v452 = vrot.slane %v291, 2
        %v453 = vrot.slane %v241, 2
        %v454 = vsel %vm441, %v452, %v453
        %v455 = vrot.slane %v302, 2
        %v456 = vsel %vm441, %v453, %v455
        %v457 = vrot.slane %v292, 2
        %v458 = vrot.slane %v244, 2
        %v459 = vsel %vm441, %v457, %v458
        %v460 = vrot.slane %v303, 2
        %v461 = vsel %vm441, %v458, %v460
        %v462 = vrot.slane %v293, 2
        %v463 = vrot.slane %v247, 2
        %v464 = vsel %vm441, %v462, %v463
        %v465 = vrot.slane %v304, 2
        %v466 = vsel %vm441, %v463, %v465
        %v482 = vadd.f32 %v289, %v444
        %v483 = vadd.f32 %v235, %v446
        %v484 = vadd.f32 %v300, %v445
        %v485 = vadd.f32 %v290, %v449
        %v486 = vadd.f32 %v238, %v451
        %v487 = vadd.f32 %v301, %v450
        %v488 = vadd.f32 %v291, %v454
        %v489 = vadd.f32 %v241, %v456
        %v490 = vadd.f32 %v302, %v455
        %v491 = vadd.f32 %v292, %v459
        %v492 = vadd.f32 %v244, %v461
        %v493 = vadd.f32 %v303, %v460
        %v494 = vadd.f32 %v293, %v464
        %v495 = vadd.f32 %v247, %v466
        %v496 = vadd.f32 %v304, %v465
        %v497 = vmul.f32 %v482, 0.23388076
        %v498 = vmul.f32 %v483, 0.23388076
        %v499 = vmul.f32 %v484, 0.23388076
        %v500 = vmul.f32 %v485, 0.23388076
        %v501 = vmul.f32 %v486, 0.23388076
        %v502 = vmul.f32 %v487, 0.23388076
        %v503 = vmul.f32 %v488, 0.23388076
        %v504 = vmul.f32 %v489, 0.23388076
        %v505 = vmul.f32 %v490, 0.23388076
        %v506 = vmul.f32 %v491, 0.23388076
        %v507 = vmul.f32 %v492, 0.23388076
        %v508 = vmul.f32 %v493, 0.23388076
        %v509 = vmul.f32 %v494, 0.23388076
        %v510 = vmul.f32 %v495, 0.23388076
        %v511 = vmul.f32 %v496, 0.23388076
        %v527 = vrot.slane %v497, 7
        %v528 = vrot.slane %v498, 7
        %v529 = vsel %vm283, %v527, %v528
        %v530 = vrot.slane %v499, 7
        %v531 = vsel %vm283, %v528, %v530
        %v532 = vrot.slane %v500, 7
        %v533 = vrot.slane %v501, 7
        %v534 = vsel %vm283, %v532, %v533
        %v535 = vrot.slane %v502, 7
        %v536 = vsel %vm283, %v533, %v535
        %v537 = vrot.slane %v503, 7
        %v538 = vrot.slane %v504, 7
        %v539 = vsel %vm283, %v537, %v538
        %v540 = vrot.slane %v505, 7
        %v541 = vsel %vm283, %v538, %v540
        %v542 = vrot.slane %v506, 7
        %v543 = vrot.slane %v507, 7
        %v544 = vsel %vm283, %v542, %v543
        %v545 = vrot.slane %v508, 7
        %v546 = vsel %vm283, %v543, %v545
        %v547 = vrot.slane %v509, 7
        %v548 = vrot.slane %v510, 7
        %v549 = vsel %vm283, %v547, %v548
        %v550 = vrot.slane %v511, 7
        %v551 = vsel %vm283, %v548, %v550
        %v567 = vadd.f32 %v426, %v527
        %v568 = vadd.f32 %v427, %v529
        %v569 = vadd.f32 %v428, %v531
        %v570 = vadd.f32 %v429, %v532
        %v571 = vadd.f32 %v430, %v534
        %v572 = vadd.f32 %v431, %v536
        %v573 = vadd.f32 %v432, %v537
        %v574 = vadd.f32 %v433, %v539
        %v575 = vadd.f32 %v434, %v541
        %v576 = vadd.f32 %v435, %v542
        %v577 = vadd.f32 %v436, %v544
        %v578 = vadd.f32 %v437, %v546
        %v579 = vadd.f32 %v438, %v547
        %v580 = vadd.f32 %v439, %v549
        %v581 = vadd.f32 %v440, %v551
        %597 = vrot.lane.b32.xlu0 %v567, 126
        %v598 = vpop.permute.xlu0 %597
        %599 = vrot.lane.b32.xlu0 %v568, 126
        %v600 = vpop.permute.xlu0 %599
        %601 = vrot.lane.b32.xlu0 %v569, 126
        %v602 = vpop.permute.xlu0 %601
        %603 = vrot.lane.b32.xlu0 %v570, 126
        %v604 = vpop.permute.xlu0 %603
        %605 = vrot.lane.b32.xlu0 %v571, 126
        %v606 = vpop.permute.xlu0 %605
        %607 = vrot.lane.b32.xlu0 %v572, 126
        %v608 = vpop.permute.xlu0 %607
        %609 = vrot.lane.b32.xlu0 %v573, 126
        %v610 = vpop.permute.xlu0 %609
        %611 = vrot.lane.b32.xlu0 %v574, 126
        %v612 = vpop.permute.xlu0 %611
        %613 = vrot.lane.b32.xlu0 %v575, 126
        %v614 = vpop.permute.xlu0 %613
        %615 = vrot.lane.b32.xlu0 %v576, 126
        %v616 = vpop.permute.xlu0 %615
        %617 = vrot.lane.b32.xlu0 %v577, 126
        %v618 = vpop.permute.xlu0 %617
        %619 = vrot.lane.b32.xlu0 %v578, 126
        %v620 = vpop.permute.xlu0 %619
        %621 = vrot.lane.b32.xlu0 %v579, 126
        %v622 = vpop.permute.xlu0 %621
        %623 = vrot.lane.b32.xlu0 %v580, 126
        %v624 = vpop.permute.xlu0 %623
        %625 = vrot.lane.b32.xlu0 %v581, 126
        %v626 = vpop.permute.xlu0 %625
        %642 = vrot.lane.b32.xlu0 %v567, 2
        %v643 = vpop.permute.xlu0 %642
        %644 = vrot.lane.b32.xlu0 %v568, 2
        %v645 = vpop.permute.xlu0 %644
        %646 = vrot.lane.b32.xlu0 %v569, 2
        %v647 = vpop.permute.xlu0 %646
        %648 = vrot.lane.b32.xlu0 %v570, 2
        %v649 = vpop.permute.xlu0 %648
        %650 = vrot.lane.b32.xlu0 %v571, 2
        %v651 = vpop.permute.xlu0 %650
        %652 = vrot.lane.b32.xlu0 %v572, 2
        %v653 = vpop.permute.xlu0 %652
        %654 = vrot.lane.b32.xlu0 %v573, 2
        %v655 = vpop.permute.xlu0 %654
        %656 = vrot.lane.b32.xlu0 %v574, 2
        %v657 = vpop.permute.xlu0 %656
        %658 = vrot.lane.b32.xlu0 %v575, 2
        %v659 = vpop.permute.xlu0 %658
        %660 = vrot.lane.b32.xlu0 %v576, 2
        %v661 = vpop.permute.xlu0 %660
        %662 = vrot.lane.b32.xlu0 %v577, 2
        %v663 = vpop.permute.xlu0 %662
        %664 = vrot.lane.b32.xlu0 %v578, 2
        %v665 = vpop.permute.xlu0 %664
        %666 = vrot.lane.b32.xlu0 %v579, 2
        %v667 = vpop.permute.xlu0 %666
        %668 = vrot.lane.b32.xlu0 %v580, 2
        %v669 = vpop.permute.xlu0 %668
        %670 = vrot.lane.b32.xlu0 %v581, 2
        %v671 = vpop.permute.xlu0 %670
        %687 = vrot.lane.b32.xlu0 %v567, 4
        %v688 = vpop.permute.xlu0 %687
        %689 = vrot.lane.b32.xlu0 %v568, 4
        %v690 = vpop.permute.xlu0 %689
        %691 = vrot.lane.b32.xlu0 %v569, 4
        %v692 = vpop.permute.xlu0 %691
        %693 = vrot.lane.b32.xlu0 %v570, 4
        %v694 = vpop.permute.xlu0 %693
        %695 = vrot.lane.b32.xlu0 %v571, 4
        %v696 = vpop.permute.xlu0 %695
        %697 = vrot.lane.b32.xlu0 %v572, 4
        %v698 = vpop.permute.xlu0 %697
        %699 = vrot.lane.b32.xlu0 %v573, 4
        %v700 = vpop.permute.xlu0 %699
        %701 = vrot.lane.b32.xlu0 %v574, 4
        %v702 = vpop.permute.xlu0 %701
        %703 = vrot.lane.b32.xlu0 %v575, 4
        %v704 = vpop.permute.xlu0 %703
        %705 = vrot.lane.b32.xlu0 %v576, 4
        %v706 = vpop.permute.xlu0 %705
        %707 = vrot.lane.b32.xlu0 %v577, 4
        %v708 = vpop.permute.xlu0 %707
        %709 = vrot.lane.b32.xlu0 %v578, 4
        %v710 = vpop.permute.xlu0 %709
        %711 = vrot.lane.b32.xlu0 %v579, 4
        %v712 = vpop.permute.xlu0 %711
        %713 = vrot.lane.b32.xlu0 %v580, 4
        %v714 = vpop.permute.xlu0 %713
        %715 = vrot.lane.b32.xlu0 %v581, 4
        %v716 = vpop.permute.xlu0 %715
        %732 = vrot.lane.b32.xlu0 %v567, 6
        %v733 = vpop.permute.xlu0 %732
        %734 = vrot.lane.b32.xlu0 %v568, 6
        %v735 = vpop.permute.xlu0 %734
        %736 = vrot.lane.b32.xlu0 %v569, 6
        %v737 = vpop.permute.xlu0 %736
        %738 = vrot.lane.b32.xlu0 %v570, 6
        %v739 = vpop.permute.xlu0 %738
        %740 = vrot.lane.b32.xlu0 %v571, 6
        %v741 = vpop.permute.xlu0 %740
        %742 = vrot.lane.b32.xlu0 %v572, 6
        %v743 = vpop.permute.xlu0 %742
        %744 = vrot.lane.b32.xlu0 %v573, 6
        %v745 = vpop.permute.xlu0 %744
        %746 = vrot.lane.b32.xlu0 %v574, 6
        %v747 = vpop.permute.xlu0 %746
        %748 = vrot.lane.b32.xlu0 %v575, 6
        %v749 = vpop.permute.xlu0 %748
        %750 = vrot.lane.b32.xlu0 %v576, 6
        %v751 = vpop.permute.xlu0 %750
        %752 = vrot.lane.b32.xlu0 %v577, 6
        %v753 = vpop.permute.xlu0 %752
        %754 = vrot.lane.b32.xlu0 %v578, 6
        %v755 = vpop.permute.xlu0 %754
        %756 = vrot.lane.b32.xlu0 %v579, 6
        %v757 = vpop.permute.xlu0 %756
        %758 = vrot.lane.b32.xlu0 %v580, 6
        %v759 = vpop.permute.xlu0 %758
        %760 = vrot.lane.b32.xlu0 %v581, 6
        %v761 = vpop.permute.xlu0 %760
        %vm777 = vcmask 7168
        %v778 = vsel %vm777, %v598, %v567
        %v779 = vsel %vm777, %v600, %v568
        %v780 = vsel %vm777, %v602, %v569
        %v781 = vsel %vm777, %v604, %v570
        %v782 = vsel %vm777, %v606, %v571
        %v783 = vsel %vm777, %v608, %v572
        %v784 = vsel %vm777, %v610, %v573
        %v785 = vsel %vm777, %v612, %v574
        %v786 = vsel %vm777, %v614, %v575
        %v787 = vsel %vm777, %v616, %v576
        %v788 = vsel %vm777, %v618, %v577
        %v789 = vsel %vm777, %v620, %v578
        %v790 = vsel %vm777, %v622, %v579
        %v791 = vsel %vm777, %v624, %v580
        %v792 = vsel %vm777, %v626, %v581
        %vm793 = vcmask 15360
        %v794 = vsel %vm793, %v778, %v643
        %v795 = vsel %vm793, %v779, %v645
        %v796 = vsel %vm793, %v780, %v647
        %v797 = vsel %vm793, %v781, %v649
        %v798 = vsel %vm793, %v782, %v651
        %v799 = vsel %vm793, %v783, %v653
        %v800 = vsel %vm793, %v784, %v655
        %v801 = vsel %vm793, %v785, %v657
        %v802 = vsel %vm793, %v786, %v659
        %v803 = vsel %vm793, %v787, %v661
        %v804 = vsel %vm793, %v788, %v663
        %v805 = vsel %vm793, %v789, %v665
        %v806 = vsel %vm793, %v790, %v667
        %v807 = vsel %vm793, %v791, %v669
        %v808 = vsel %vm793, %v792, %v671
        %vm809 = vcmask 146432
        %v810 = vsel %vm809, %v794, %v688
        %v811 = vsel %vm809, %v795, %v690
        %v812 = vsel %vm809, %v796, %v692
        %v813 = vsel %vm809, %v797, %v694
        %v814 = vsel %vm809, %v798, %v696
        %v815 = vsel %vm809, %v799, %v698
        %v816 = vsel %vm809, %v800, %v700
        %v817 = vsel %vm809, %v801, %v702
        %v818 = vsel %vm809, %v802, %v704
        %v819 = vsel %vm809, %v803, %v706
        %v820 = vsel %vm809, %v804, %v708
        %v821 = vsel %vm809, %v805, %v710
        %v822 = vsel %vm809, %v806, %v712
        %v823 = vsel %vm809, %v807, %v714
        %v824 = vsel %vm809, %v808, %v716
        %vm825 = vcmask 154624
        %v826 = vsel %vm825, %v810, %v733
        %v827 = vsel %vm825, %v811, %v735
        %v828 = vsel %vm825, %v812, %v737
        %v829 = vsel %vm825, %v813, %v739
        %v830 = vsel %vm825, %v814, %v741
        %v831 = vsel %vm825, %v815, %v743
        %v832 = vsel %vm825, %v816, %v745
        %v833 = vsel %vm825, %v817, %v747
        %v834 = vsel %vm825, %v818, %v749
        %v835 = vsel %vm825, %v819, %v751
        %v836 = vsel %vm825, %v820, %v753
        %v837 = vsel %vm825, %v821, %v755
        %v838 = vsel %vm825, %v822, %v757
        %v839 = vsel %vm825, %v823, %v759
        %v840 = vsel %vm825, %v824, %v761
        %v841 = vmul.f32 %v826, 0.2920817
        %v842 = vmul.f32 %v827, 0.2920817
        %v843 = vmul.f32 %v828, 0.2920817
        %v844 = vmul.f32 %v829, 0.2920817
        %v845 = vmul.f32 %v830, 0.2920817
        %v846 = vmul.f32 %v831, 0.2920817
        %v847 = vmul.f32 %v832, 0.2920817
        %v848 = vmul.f32 %v833, 0.2920817
        %v849 = vmul.f32 %v834, 0.2920817
        %v850 = vmul.f32 %v835, 0.2920817
        %v851 = vmul.f32 %v836, 0.2920817
        %v852 = vmul.f32 %v837, 0.2920817
        %v853 = vmul.f32 %v838, 0.2920817
        %v854 = vmul.f32 %v839, 0.2920817
        %v855 = vmul.f32 %v840, 0.2920817
        %871 = vrot.lane.b32.xlu0 %v826, 124
        %v872 = vpop.permute.xlu0 %871
        %873 = vrot.lane.b32.xlu0 %v827, 124
        %v874 = vpop.permute.xlu0 %873
        %875 = vrot.lane.b32.xlu0 %v828, 124
        %v876 = vpop.permute.xlu0 %875
        %877 = vrot.lane.b32.xlu0 %v829, 124
        %v878 = vpop.permute.xlu0 %877
        %879 = vrot.lane.b32.xlu0 %v830, 124
        %v880 = vpop.permute.xlu0 %879
        %881 = vrot.lane.b32.xlu0 %v831, 124
        %v882 = vpop.permute.xlu0 %881
        %883 = vrot.lane.b32.xlu0 %v832, 124
        %v884 = vpop.permute.xlu0 %883
        %885 = vrot.lane.b32.xlu0 %v833, 124
        %v886 = vpop.permute.xlu0 %885
        %887 = vrot.lane.b32.xlu0 %v834, 124
        %v888 = vpop.permute.xlu0 %887
        %889 = vrot.lane.b32.xlu0 %v835, 124
        %v890 = vpop.permute.xlu0 %889
        %891 = vrot.lane.b32.xlu0 %v836, 124
        %v892 = vpop.permute.xlu0 %891
        %893 = vrot.lane.b32.xlu0 %v837, 124
        %v894 = vpop.permute.xlu0 %893
        %895 = vrot.lane.b32.xlu0 %v838, 124
        %v896 = vpop.permute.xlu0 %895
        %897 = vrot.lane.b32.xlu0 %v839, 124
        %v898 = vpop.permute.xlu0 %897
        %899 = vrot.lane.b32.xlu0 %v840, 124
        %v900 = vpop.permute.xlu0 %899
        %v916 = vadd.f32 %v826, %v872
        %v917 = vadd.f32 %v827, %v874
        %v918 = vadd.f32 %v828, %v876
        %v919 = vadd.f32 %v829, %v878
        %v920 = vadd.f32 %v830, %v880
        %v921 = vadd.f32 %v831, %v882
        %v922 = vadd.f32 %v832, %v884
        %v923 = vadd.f32 %v833, %v886
        %v924 = vadd.f32 %v834, %v888
        %v925 = vadd.f32 %v835, %v890
        %v926 = vadd.f32 %v836, %v892
        %v927 = vadd.f32 %v837, %v894
        %v928 = vadd.f32 %v838, %v896
        %v929 = vadd.f32 %v839, %v898
        %v930 = vadd.f32 %v840, %v900
        %v931 = vmul.f32 %v916, 0.120078385
        %v932 = vmul.f32 %v917, 0.120078385
        %v933 = vmul.f32 %v918, 0.120078385
        %v934 = vmul.f32 %v919, 0.120078385
        %v935 = vmul.f32 %v920, 0.120078385
        %v936 = vmul.f32 %v921, 0.120078385
        %v937 = vmul.f32 %v922, 0.120078385
        %v938 = vmul.f32 %v923, 0.120078385
        %v939 = vmul.f32 %v924, 0.120078385
        %v940 = vmul.f32 %v925, 0.120078385
        %v941 = vmul.f32 %v926, 0.120078385
        %v942 = vmul.f32 %v927, 0.120078385
        %v943 = vmul.f32 %v928, 0.120078385
        %v944 = vmul.f32 %v929, 0.120078385
        %v945 = vmul.f32 %v930, 0.120078385
        %961 = vrot.lane.b32.xlu0 %v931, 2
        %v962 = vpop.permute.xlu0 %961
        %963 = vrot.lane.b32.xlu0 %v932, 2
        %v964 = vpop.permute.xlu0 %963
        %965 = vrot.lane.b32.xlu0 %v933, 2
        %v966 = vpop.permute.xlu0 %965
        %967 = vrot.lane.b32.xlu0 %v934, 2
        %v968 = vpop.permute.xlu0 %967
        %969 = vrot.lane.b32.xlu0 %v935, 2
        %v970 = vpop.permute.xlu0 %969
        %971 = vrot.lane.b32.xlu0 %v936, 2
        %v972 = vpop.permute.xlu0 %971
        %973 = vrot.lane.b32.xlu0 %v937, 2
        %v974 = vpop.permute.xlu0 %973
        %975 = vrot.lane.b32.xlu0 %v938, 2
        %v976 = vpop.permute.xlu0 %975
        %977 = vrot.lane.b32.xlu0 %v939, 2
        %v978 = vpop.permute.xlu0 %977
        %979 = vrot.lane.b32.xlu0 %v940, 2
        %v980 = vpop.permute.xlu0 %979
        %981 = vrot.lane.b32.xlu0 %v941, 2
        %v982 = vpop.permute.xlu0 %981
        %983 = vrot.lane.b32.xlu0 %v942, 2
        %v984 = vpop.permute.xlu0 %983
        %985 = vrot.lane.b32.xlu0 %v943, 2
        %v986 = vpop.permute.xlu0 %985
        %987 = vrot.lane.b32.xlu0 %v944, 2
        %v988 = vpop.permute.xlu0 %987
        %989 = vrot.lane.b32.xlu0 %v945, 2
        %v990 = vpop.permute.xlu0 %989
        %v1006 = vadd.f32 %v841, %v962
        %v1007 = vadd.f32 %v842, %v964
        %v1008 = vadd.f32 %v843, %v966
        %v1009 = vadd.f32 %v844, %v968
        %v1010 = vadd.f32 %v845, %v970
        %v1011 = vadd.f32 %v846, %v972
        %v1012 = vadd.f32 %v847, %v974
        %v1013 = vadd.f32 %v848, %v976
        %v1014 = vadd.f32 %v849, %v978
        %v1015 = vadd.f32 %v850, %v980
        %v1016 = vadd.f32 %v851, %v982
        %v1017 = vadd.f32 %v852, %v984
        %v1018 = vadd.f32 %v853, %v986
        %v1019 = vadd.f32 %v854, %v988
        %v1020 = vadd.f32 %v855, %v990
        %1021 = vrot.lane.b32.xlu0 %v826, 126
        %v1022 = vpop.permute.xlu0 %1021
        %1023 = vrot.lane.b32.xlu0 %v827, 126
        %v1024 = vpop.permute.xlu0 %1023
        %1025 = vrot.lane.b32.xlu0 %v828, 126
        %v1026 = vpop.permute.xlu0 %1025
        %1027 = vrot.lane.b32.xlu0 %v829, 126
        %v1028 = vpop.permute.xlu0 %1027
        %1029 = vrot.lane.b32.xlu0 %v830, 126
        %v1030 = vpop.permute.xlu0 %1029
        %1031 = vrot.lane.b32.xlu0 %v831, 126
        %v1032 = vpop.permute.xlu0 %1031
        %1033 = vrot.lane.b32.xlu0 %v832, 126
        %v1034 = vpop.permute.xlu0 %1033
        %1035 = vrot.lane.b32.xlu0 %v833, 126
        %v1036 = vpop.permute.xlu0 %1035
        %1037 = vrot.lane.b32.xlu0 %v834, 126
        %v1038 = vpop.permute.xlu0 %1037
        %1039 = vrot.lane.b32.xlu0 %v835, 126
        %v1040 = vpop.permute.xlu0 %1039
        %1041 = vrot.lane.b32.xlu0 %v836, 126
        %v1042 = vpop.permute.xlu0 %1041
        %1043 = vrot.lane.b32.xlu0 %v837, 126
        %v1044 = vpop.permute.xlu0 %1043
        %1045 = vrot.lane.b32.xlu0 %v838, 126
        %v1046 = vpop.permute.xlu0 %1045
        %1047 = vrot.lane.b32.xlu0 %v839, 126
        %v1048 = vpop.permute.xlu0 %1047
        %1049 = vrot.lane.b32.xlu0 %v840, 126
        %v1050 = vpop.permute.xlu0 %1049
        %v1066 = vadd.f32 %v826, %v1022
        %v1067 = vadd.f32 %v827, %v1024
        %v1068 = vadd.f32 %v828, %v1026
        %v1069 = vadd.f32 %v829, %v1028
        %v1070 = vadd.f32 %v830, %v1030
        %v1071 = vadd.f32 %v831, %v1032
        %v1072 = vadd.f32 %v832, %v1034
        %v1073 = vadd.f32 %v833, %v1036
        %v1074 = vadd.f32 %v834, %v1038
        %v1075 = vadd.f32 %v835, %v1040
        %v1076 = vadd.f32 %v836, %v1042
        %v1077 = vadd.f32 %v837, %v1044
        %v1078 = vadd.f32 %v838, %v1046
        %v1079 = vadd.f32 %v839, %v1048
        %v1080 = vadd.f32 %v840, %v1050
        %v1081 = vmul.f32 %v1066, 0.23388076
        %v1082 = vmul.f32 %v1067, 0.23388076
        %v1083 = vmul.f32 %v1068, 0.23388076
        %v1084 = vmul.f32 %v1069, 0.23388076
        %v1085 = vmul.f32 %v1070, 0.23388076
        %v1086 = vmul.f32 %v1071, 0.23388076
        %v1087 = vmul.f32 %v1072, 0.23388076
        %v1088 = vmul.f32 %v1073, 0.23388076
        %v1089 = vmul.f32 %v1074, 0.23388076
        %v1090 = vmul.f32 %v1075, 0.23388076
        %v1091 = vmul.f32 %v1076, 0.23388076
        %v1092 = vmul.f32 %v1077, 0.23388076
        %v1093 = vmul.f32 %v1078, 0.23388076
        %v1094 = vmul.f32 %v1079, 0.23388076
        %v1095 = vmul.f32 %v1080, 0.23388076
        %1111 = vrot.lane.b32.xlu0 %v1081, 1
        %v1112 = vpop.permute.xlu0 %1111
        %1113 = vrot.lane.b32.xlu0 %v1082, 1
        %v1114 = vpop.permute.xlu0 %1113
        %1115 = vrot.lane.b32.xlu0 %v1083, 1
        %v1116 = vpop.permute.xlu0 %1115
        %1117 = vrot.lane.b32.xlu0 %v1084, 1
        %v1118 = vpop.permute.xlu0 %1117
        %1119 = vrot.lane.b32.xlu0 %v1085, 1
        %v1120 = vpop.permute.xlu0 %1119
        %1121 = vrot.lane.b32.xlu0 %v1086, 1
        %v1122 = vpop.permute.xlu0 %1121
        %1123 = vrot.lane.b32.xlu0 %v1087, 1
        %v1124 = vpop.permute.xlu0 %1123
        %1125 = vrot.lane.b32.xlu0 %v1088, 1
        %v1126 = vpop.permute.xlu0 %1125
        %1127 = vrot.lane.b32.xlu0 %v1089, 1
        %v1128 = vpop.permute.xlu0 %1127
        %1129 = vrot.lane.b32.xlu0 %v1090, 1
        %v1130 = vpop.permute.xlu0 %1129
        %1131 = vrot.lane.b32.xlu0 %v1091, 1
        %v1132 = vpop.permute.xlu0 %1131
        %1133 = vrot.lane.b32.xlu0 %v1092, 1
        %v1134 = vpop.permute.xlu0 %1133
        %1135 = vrot.lane.b32.xlu0 %v1093, 1
        %v1136 = vpop.permute.xlu0 %1135
        %1137 = vrot.lane.b32.xlu0 %v1094, 1
        %v1138 = vpop.permute.xlu0 %1137
        %1139 = vrot.lane.b32.xlu0 %v1095, 1
        %v1140 = vpop.permute.xlu0 %1139
        %v1156 = vadd.f32 %v1006, %v1112
        %v1157 = vadd.f32 %v1007, %v1114
        %v1158 = vadd.f32 %v1008, %v1116
        %v1159 = vadd.f32 %v1009, %v1118
        %v1160 = vadd.f32 %v1010, %v1120
        %v1161 = vadd.f32 %v1011, %v1122
        %v1162 = vadd.f32 %v1012, %v1124
        %v1163 = vadd.f32 %v1013, %v1126
        %v1164 = vadd.f32 %v1014, %v1128
        %v1165 = vadd.f32 %v1015, %v1130
        %v1166 = vadd.f32 %v1016, %v1132
        %v1167 = vadd.f32 %v1017, %v1134
        %v1168 = vadd.f32 %v1018, %v1136
        %v1169 = vadd.f32 %v1019, %v1138
        %v1170 = vadd.f32 %v1020, %v1140
        %v1171 = vmul.f32 %v1156, %v1156
        %v1172 = vmul.f32 %v1157, %v1157
        %v1173 = vmul.f32 %v1158, %v1158
        %v1174 = vmul.f32 %v1159, %v1159
        %v1175 = vmul.f32 %v1160, %v1160
        %v1176 = vmul.f32 %v1161, %v1161
        %v1177 = vmul.f32 %v1156, %v1159
        %v1178 = vmul.f32 %v1157, %v1160
        %v1179 = vmul.f32 %v1158, %v1161
        %v1180 = vsub.f32 %v1162, %v1171
        %v1181 = vsub.f32 %v1163, %v1172
        %v1182 = vsub.f32 %v1164, %v1173
        %v1183 = vsub.f32 %v1165, %v1174
        %v1184 = vsub.f32 %v1166, %v1175
        %v1185 = vsub.f32 %v1167, %v1176
        %v1186 = vsub.f32 %v1168, %v1177
        %v1187 = vsub.f32 %v1169, %v1178
        %v1188 = vsub.f32 %v1170, %v1179
        %v1189 = vmul.f32 %v1177, 2.0
        %v1190 = vmul.f32 %v1178, 2.0
        %v1191 = vmul.f32 %v1179, 2.0
        %v1192 = vadd.f32 %v1189, 0.0001
        %v1193 = vadd.f32 %v1190, 0.0001
        %v1194 = vadd.f32 %v1191, 0.0001
        %v1195 = vmul.f32 %v1186, 2.0
        %v1196 = vmul.f32 %v1187, 2.0
        %v1197 = vmul.f32 %v1188, 2.0
        %v1198 = vadd.f32 %v1195, 0.0009
        %v1199 = vadd.f32 %v1196, 0.0009
        %v1200 = vadd.f32 %v1197, 0.0009
        %v1201 = vmul.f32 %v1192, %v1198
        %v1202 = vmul.f32 %v1193, %v1199
        %v1203 = vmul.f32 %v1194, %v1200
        %v1204 = vadd.f32 %v1171, %v1174
        %v1205 = vadd.f32 %v1172, %v1175
        %v1206 = vadd.f32 %v1173, %v1176
        %v1207 = vadd.f32 %v1204, 0.0001
        %v1208 = vadd.f32 %v1205, 0.0001
        %v1209 = vadd.f32 %v1206, 0.0001
        %v1210 = vadd.f32 %v1180, %v1183
        %v1211 = vadd.f32 %v1181, %v1184
        %v1212 = vadd.f32 %v1182, %v1185
        %v1213 = vadd.f32 %v1210, 0.0009
        %v1214 = vadd.f32 %v1211, 0.0009
        %v1215 = vadd.f32 %v1212, 0.0009
        %v1216 = vmul.f32 %v1207, %v1213
        %v1217 = vmul.f32 %v1208, %v1214
        %v1218 = vmul.f32 %v1209, %v1215
        %v1219 = vadd.f32 %v1216, 1e-12
        %v1220 = vadd.f32 %v1217, 1e-12
        %v1221 = vadd.f32 %v1218, 1e-12
        %v1222 = vrcp.pop %v1219
        %v1223 = vrcp.pop %v1220
        %v1224 = vrcp.pop %v1221
        %v1225 = vmul.f32 %v1201, %v1222
        %v1226 = vmul.f32 %v1202, %v1223
        %v1227 = vmul.f32 %v1203, %v1224
        %v1228 = vsub.f32 1.0, %v1225
        %v1229 = vsub.f32 1.0, %v1226
        %v1230 = vsub.f32 1.0, %v1227
        %v1231 = vmul.f32 %v1228, 0.5
        %v1232 = vmul.f32 %v1229, 0.5
        %v1233 = vmul.f32 %v1230, 0.5
        %v1234 = vmax.f32 %v1231, 0.0
        %v1235 = vmax.f32 %v1232, 0.0
        %v1236 = vmax.f32 %v1233, 0.0
        %v1237 = vmin.f32 %v1234, 1.0
        %v1238 = vmin.f32 %v1235, 1.0
        %v1239 = vmin.f32 %v1236, 1.0
        %v1243 = vrot.slane %v1237, 2
        %v1244 = vrot.slane %v1238, 2
        %v1245 = vsel %vm441, %v1243, %v1244
        %v1246 = vrot.slane %v1239, 2
        %v1247 = vsel %vm441, %v1244, %v1246
        %1248 = vrot.lane.b32.xlu0 %v1245, 126
        %v1249 = vpop.permute.xlu0 %1248
        %1250 = vrot.lane.b32.xlu0 %v1247, 126
        %v1251 = vpop.permute.xlu0 %1250
        %vm1254 = vcmask 130048
        %v1255 = vsel %vm1254, %v1249, 0.0
        %v1256 = vsel %vm1254, %v1251, 0.0
        %v1257 = vadd.f32 %v1255, %v1256
        %1258 = vadd.xlane.f32.xlu0 %v1257
        %v1259 = vpop.xlane.xlu0 %1258
        %v1260 = vrot.slane %v1259, 4
        %v1261 = vadd.f32 %v1259, %v1260
        %v1262 = vrot.slane %v1261, 2
        %v1263 = vadd.f32 %v1261, %v1262
        %v1264 = vrot.slane %v1263, 1
        %v1265 = vadd.f32 %v1263, %v1264
        %s1266 = vtos %v1265
        %v1267 = vstv %s1266
        %1268 = vst [vmem:[%s201] sm:$0xff] %v1267
        %s1269 = sand.u32 %s82, 1
        %s1270 = scalar_lea.sflag [#allocation4], %s1269
        %s1271 = sand.u32 %s82, 1
        %s1272 = smul.addr %s1271, 8
        %s1273 = scalar_lea.vmem [#allocation7], %s1272
        // Predicated region
        $region37: #{tpu_custom_call.1} parent=27 // pred_check
          %p1274 = pneg %p92
        $region38: #{tpu_custom_call.1} parent=27 // pred_check_branch
          %1276 = sbr.rel (%p1274) target = $region40
        $region39: #{tpu_custom_call.1} parent=27 // pred_region
          %s1278 = ssub.s32 128, 128
          %1279 = vsyncadd %s1270, %s1278
          %s1280 = smul.addr %s22, 128
          %s1281 = scalar_lea.hbm %s2, %s1280
          %s1283 = sshll.u32 %s1273, 4
          %s1284 = int_to_ptr.vmem [resolvable:$true] %s1283
          %1286 = dma.vmem_to_hbm [thread:$0]  %s1284, 128, %s1281, %s1270
        $region40: #{tpu_custom_call.1} parent=27 // pred_fallthru
          _
      $region28: #{tpu_custom_call.1} parent=5 // pred_fallthru
        _
      %p1287 = scmp.le.s32.totalorder 2, %s17
      // Predicated region
      $region41: #{tpu_custom_call.1} parent=5 // pred_check
        %p1288 = pneg %p1287
      $region42: #{tpu_custom_call.1} parent=5 // pred_check_branch
        %1290 = sbr.rel (%p1288) target = $region44
      $region43: #{tpu_custom_call.1} parent=5 // pred_region
        %s1291 = ssub.s32 %s17, 2
        // Predicated region
        $region45: #{tpu_custom_call.1} parent=43 // pred_check
          %p1292 = pneg %p98
        $region46: #{tpu_custom_call.1} parent=43 // pred_check_branch
          %1294 = sbr.rel (%p1292) target = $region48
        $region47: #{tpu_custom_call.1} parent=43 // pred_region
          %s1295 = sand.u32 %s83, 1
          %s1296 = scalar_lea.sflag [#allocation4], %s1295
          %s1297 = sand.u32 %s83, 1
          %s1298 = smul.addr %s1297, 8
          %s1299 = scalar_lea.vmem [#allocation7], %s1298
          %1300 = dma.done %s1296, 128
        $region48: #{tpu_custom_call.1} parent=43 // pred_fallthru
          _
      $region44: #{tpu_custom_call.1} parent=5 // pred_fallthru
        _
    $region6: #{tpu_custom_call.1} parent=1 // loop_footer
      %s21 = sadd.s32 1, %s17
    $region7: #{tpu_custom_call.1} parent=1 // loop_footer_branch
      %16 = sbr.rel target = $region3
    $region8: #{tpu_custom_call.1} parent=1 // loop_exit
      _
    %1301 = vsyncpa [#allocation3], 1
    %s1302 = scalar_lea.sflag [#allocation3], 1
    %1303 = vsyncpa %s1302, 1
    %1304 = vsyncpa [#allocation6], 1
    %s1305 = scalar_lea.sflag [#allocation6], 1
    %1306 = vsyncpa %s1305, 1
    %1307 = vsyncpa [#allocation4], 1
    %s1308 = scalar_lea.sflag [#allocation4], 1
    %1309 = vsyncpa %s1308, 1

</llo_original>
